<compile_context>
chip_gen: v7x
topology: tpu7x:2x2x1
jax: 0.10.0
libtpu: 0.0.40
codegen_flags: <defaults>
</compile_context>

<pallas_src>
import jax
import jax.numpy as jnp
from jax.experimental import pallas as pl
from jax.experimental.pallas import tpu as pltpu


def _representations_kernel(x_ref, e_ref, p_ref, out_ref):
    """Fused Normal + Cauchy log-prob.

    x_ref  : (tile_n, F)      batch tile of raw features.
    e_ref  : (F, FMp)         constant 0/1 expansion matrix, E[f, f*M+m] = 1.
    p_ref  : (8, FMp)         raw params; rows 0=mu, 1=sigma, 2=loc, 3=scale, 4..7 pad.
    out_ref: (tile_n, 2*FMp)  [: , 0:FMp]  = Normal log-prob (flattened (F, M) + pad)
                              [: , FMp: ]  = Cauchy log-prob (flattened (F, M) + pad)
    """
    FMp = e_ref.shape[1]

    # Lane expansion on the otherwise-idle MXU: xr[n, f*M + m] = x[n, f].
    # Exact (E is 0/1), avoids any wrapper-side repeated HBM intermediate.
    xr = jnp.dot(x_ref[...], e_ref[...], preferred_element_type=jnp.float32)

    mu    = p_ref[0:1, :]          # (1, FMp) rows broadcast over batch sublanes
    sigma = p_ref[1:2, :]
    loc   = p_ref[2:3, :]
    scale = p_ref[3:4, :]

    # Derived rows on the tiny resident (1, FMp) tiles (EUP/VPU; once per grid step).
    sig2      = sigma * sigma
    neg_h_ivar = -0.5 / sig2                                   # -0.5 / sigma^2
    bias_n     = -0.5 * jnp.log((2.0 * jnp.pi) * sig2)         # -log(sigma) - 0.5*log(2*pi)
    inv_scl2   = 1.0 / (scale * scale)
    bias_c     = -jnp.log(jnp.pi * scale)                      # -log(pi) - log(scale)

    # Normal log-prob.
    dn = xr - mu
    out_ref[:, 0:FMp] = (bias_n + (dn * dn) * neg_h_ivar).astype(out_ref.dtype)

    # Cauchy log-prob.
    dc = xr - loc
    out_ref[:, FMp:2 * FMp] = (bias_c - jnp.log1p((dc * dc) * inv_scl2)).astype(out_ref.dtype)


def _choose_tile_n(N, row_bytes, target_bytes=4 << 20, min_steps=2):
    """Largest multiple-of-8 divisor of N with output tile <= ~target_bytes and
    at least `min_steps` (even) grid steps so both v7x TensorCores get work."""
    if N % 8 != 0:
        return N  # full-array block is always legal
    cap = max(8, (target_bytes // max(row_bytes, 1)) // 8 * 8)
    if N >= 8 * min_steps:
        cap = min(cap, max(8, (N // min_steps) // 8 * 8))
    cap = min(cap, N)
    t = cap
    while t >= 8:
        if N % t == 0:
            return t
        t -= 8
    return N


def pack_representation_params(params):
    """Pack raw leaf parameters into kernel-ready constants.

    Call once and cache; the per-call forward then runs a single Pallas op.
    Returns dict with:
      packed : (8, FMp) f32 rows [mu, sigma, loc, scale, 0, 0, 0, 0] (lane-padded)
      expand : (F, FMp) f32 0/1 expansion matrix
      F, M, FM, FMp : layout metadata
    """
    mu = params["normal_mu"].astype(jnp.float32)
    sigma = params["normal_sigma"].astype(jnp.float32)
    loc = params["cauchy_loc"].astype(jnp.float32)
    scale = params["cauchy_scale"].astype(jnp.float32)
    F, M = mu.shape
    FM = F * M
    FMp = ((FM + 127) // 128) * 128  # pad to full 128-lane vregs -> unmasked stores

    def row(a, pad_val):
        return jnp.pad(a.reshape(FM), (0, FMp - FM), constant_values=pad_val)

    zeros = jnp.zeros((FMp,), jnp.float32)
    packed = jnp.stack(
        [row(mu, 0.0), row(sigma, 1.0), row(loc, 0.0), row(scale, 1.0),
         zeros, zeros, zeros, zeros],
        axis=0,
    )  # (8, FMp)

    lane = jnp.arange(FMp)
    expand = ((lane[None, :] // M) == jnp.arange(F)[:, None]) & (lane[None, :] < FM)
    expand = expand.astype(jnp.float32)  # (F, FMp)

    return {"packed": packed, "expand": expand, "F": F, "M": M, "FM": FM, "FMp": FMp}


def representations_forward(x, packed_state, *, tile_n=None, out_dtype=jnp.float32):
    """x: (N, F) float -> (N, 2F, M) log-likelihoods ([Normal block | Cauchy block]).

    out_dtype=jnp.bfloat16 halves HBM writeback on this mem-bound kernel; kept
    float32 by default to match the PyTorch reference.
    """
    F = packed_state["F"]
    M = packed_state["M"]
    FM = packed_state["FM"]
    FMp = packed_state["FMp"]

    N, F_in = x.shape
    assert F_in == F, (F_in, F)
    x = x.astype(jnp.float32)

    out_row_bytes = 2 * FMp * jnp.dtype(out_dtype).itemsize
    if tile_n is None:
        tile_n = _choose_tile_n(N, out_row_bytes)
    assert N % tile_n == 0, "tile_n must divide N"
    assert tile_n == N or tile_n % 8 == 0, "tile_n must be a multiple of 8 (or equal N)"

    grid = (N // tile_n,)

    out_flat = pl.pallas_call(
        _representations_kernel,
        out_shape=jax.ShapeDtypeStruct((N, 2 * FMp), out_dtype),
        grid_spec=pltpu.PrefetchScalarGridSpec(
            num_scalar_prefetch=0,
            grid=grid,
            in_specs=[
                pl.BlockSpec((tile_n, F), lambda i: (i, 0)),   # lean x tile (no repeat)
                pl.BlockSpec((F, FMp), lambda i: (0, 0)),      # expansion matrix (resident)
                pl.BlockSpec((8, FMp), lambda i: (0, 0)),      # raw params (resident)
            ],
            out_specs=pl.BlockSpec((tile_n, 2 * FMp), lambda i: (i, 0)),
        ),
        compiler_params=pltpu.CompilerParams(
            dimension_semantics=("parallel",),
        ),
    )(x, packed_state["expand"], packed_state["packed"])

    if FMp == FM:
        # Free contiguous reshape: [normal block | cauchy block] == torch.cat(dim=1).
        return out_flat.reshape(N, 2 * F, M).astype(out_dtype)
    # Padded-lane case (FM not a multiple of 128): slice off the pad lanes.
    normal = out_flat[:, :FM].reshape(N, F, M)
    cauchy = out_flat[:, FMp:FMp + FM].reshape(N, F, M)
    return jnp.concatenate([normal, cauchy], axis=1)


def representations_reference(x, params):
    """Pure-JAX reference mirroring the PyTorch forward semantics."""
    xe = x[:, :, None]
    mu, sigma = params["normal_mu"][None], params["normal_sigma"][None]
    z = (xe - mu) / sigma
    log_normal = -0.5 * z * z - jnp.log(sigma) - 0.5 * jnp.log(2.0 * jnp.pi)
    loc, scale = params["cauchy_loc"][None], params["cauchy_scale"][None]
    y = (xe - loc) / scale
    log_cauchy = -jnp.log(jnp.pi) - jnp.log(scale) - jnp.log1p(y * y)
    return jnp.concatenate([log_normal, log_cauchy], axis=1)


def init_params(key, in_features, multiplicity):
    """Deterministic parameter init (mimics torchspn: means ~ randn, scales ~ rand)."""
    k_mu, k_sigma, k_loc, k_scale = jax.random.split(key, 4)
    shape = (in_features, multiplicity)
    return {
        "normal_mu": jax.random.normal(k_mu, shape, jnp.float32),
        "normal_sigma": jax.random.uniform(k_sigma, shape, jnp.float32, 0.5, 1.5),
        "cauchy_loc": jax.random.normal(k_loc, shape, jnp.float32),
        "cauchy_scale": jax.random.uniform(k_scale, shape, jnp.float32, 0.5, 1.5),
    }


if __name__ == "__main__":
    # Shapes implied by the module: in_features=16, multiplicity=8; batch N=512
    # so the heuristic picks tile_n=256 -> 2 grid steps (even, feeds both v7x TCs).
    N, F, M = 512, 16, 8
    key = jax.random.PRNGKey(0)
    k_x, k_p = jax.random.split(key)

    x = jax.random.normal(k_x, (N, F), jnp.float32)
    params = init_params(k_p, F, M)

    # TODO(synk): dropout > 0 would require in-kernel Bernoulli masking via
    # pltpu.prng_seed/prng_random_bits; dropout=0.0 here so it is a no-op.

    packed_state = pack_representation_params(params)   # pack once, reuse per call
    out = representations_forward(x, packed_state)
    out = jax.block_until_ready(out)

    ref = representations_reference(x, params)
    assert out.shape == (N, 2 * F, M), out.shape
    assert jnp.allclose(out, ref, atol=1e-5, rtol=1e-5), "mismatch vs JAX reference"

    print("KERNEL_OK")
</pallas_src>

<mosaic_0001>
module attributes {stable_mosaic.version = 11 : i64} {
  func.func @_representations_kernel(%arg0: i32, %arg1: memref<256x16xf32, #tpu.memory_space<vmem>>, %arg2: memref<16x128xf32, #tpu.memory_space<vmem>>, %arg3: memref<8x128xf32, #tpu.memory_space<vmem>>, %arg4: memref<256x256xf32, #tpu.memory_space<vmem>>) attributes {dimension_semantics = [#tpu.dimension_semantics<parallel>], iteration_bounds = array<i64: 2>, scalar_prefetch = 0 : i64, scratch_operands = 0 : i64, tpu.core_type = #tpu.core_type<tc>, window_params = [{transform_indices = @transform_0, window_bounds = array<i64: 256, 16>}, {pipeline_mode = #tpu.pipeline_mode<synchronous>, transform_indices = @transform_1, window_bounds = array<i64: 16, 128>}, {pipeline_mode = #tpu.pipeline_mode<synchronous>, transform_indices = @transform_2, window_bounds = array<i64: 8, 128>}, {transform_indices = @transform_3, window_bounds = array<i64: 256, 256>}]} {
    %c0 = arith.constant 0 : index
    %c0_0 = arith.constant 0 : index
    %0 = vector.load %arg1[%c0, %c0_0] : memref<256x16xf32, #tpu.memory_space<vmem>>, vector<256x16xf32>
    %c0_1 = arith.constant 0 : index
    %c0_2 = arith.constant 0 : index
    %1 = vector.load %arg2[%c0_1, %c0_2] : memref<16x128xf32, #tpu.memory_space<vmem>>, vector<16x128xf32>
    %cst = arith.constant dense<0.000000e+00> : vector<256x128xf32>
    %2 = tpu.matmul %0, %1, %cst {dimension_numbers = #tpu.dot_dimension_numbers<[1], [0], [0], [1], [0, 0, 1, 1], [], []>} : vector<256x16xf32>, vector<16x128xf32>, vector<256x128xf32> -> vector<256x128xf32>
    %c0_3 = arith.constant 0 : index
    %c0_4 = arith.constant 0 : index
    %3 = vector.load %arg3[%c0_3, %c0_4] : memref<8x128xf32, #tpu.memory_space<vmem>>, vector<1x128xf32>
    %c1 = arith.constant 1 : index
    %c0_5 = arith.constant 0 : index
    %4 = vector.load %arg3[%c1, %c0_5] : memref<8x128xf32, #tpu.memory_space<vmem>>, vector<1x128xf32>
    %c2 = arith.constant 2 : index
    %c0_6 = arith.constant 0 : index
    %5 = vector.load %arg3[%c2, %c0_6] : memref<8x128xf32, #tpu.memory_space<vmem>>, vector<1x128xf32>
    %c3 = arith.constant 3 : index
    %c0_7 = arith.constant 0 : index
    %6 = vector.load %arg3[%c3, %c0_7] : memref<8x128xf32, #tpu.memory_space<vmem>>, vector<1x128xf32>
    %7 = arith.mulf %4, %4 : vector<1x128xf32>
    %cst_8 = arith.constant -5.000000e-01 : f32
    %8 = vector.broadcast %cst_8 : f32 to vector<1x128xf32>
    %9 = arith.divf %8, %7 : vector<1x128xf32>
    %cst_9 = arith.constant 6.28318548 : f32
    %10 = vector.broadcast %cst_9 : f32 to vector<1x128xf32>
    %11 = arith.mulf %10, %7 : vector<1x128xf32>
    %12 = math.log %11 : vector<1x128xf32>
    %cst_10 = arith.constant -5.000000e-01 : f32
    %13 = vector.broadcast %cst_10 : f32 to vector<1x128xf32>
    %14 = arith.mulf %13, %12 : vector<1x128xf32>
    %15 = arith.mulf %6, %6 : vector<1x128xf32>
    %cst_11 = arith.constant 1.000000e+00 : f32
    %16 = vector.broadcast %cst_11 : f32 to vector<1x128xf32>
    %17 = arith.divf %16, %15 : vector<1x128xf32>
    %cst_12 = arith.constant 3.14159274 : f32
    %18 = vector.broadcast %cst_12 : f32 to vector<1x128xf32>
    %19 = arith.mulf %18, %6 : vector<1x128xf32>
    %20 = math.log %19 : vector<1x128xf32>
    %cst_13 = arith.constant 0.000000e+00 : f32
    %21 = vector.broadcast %cst_13 : f32 to vector<1x128xf32>
    %22 = arith.subf %21, %20 : vector<1x128xf32>
    %23 = vector.broadcast %3 : vector<1x128xf32> to vector<256x128xf32>
    %24 = arith.subf %2, %23 : vector<256x128xf32>
    %25 = arith.mulf %24, %24 : vector<256x128xf32>
    %26 = vector.broadcast %9 : vector<1x128xf32> to vector<256x128xf32>
    %27 = arith.mulf %25, %26 : vector<256x128xf32>
    %28 = vector.broadcast %14 : vector<1x128xf32> to vector<256x128xf32>
    %29 = arith.addf %28, %27 : vector<256x128xf32>
    %c0_14 = arith.constant 0 : index
    %c0_15 = arith.constant 0 : index
    %30 = vector.load %arg4[%c0_14, %c0_15] : memref<256x256xf32, #tpu.memory_space<vmem>>, vector<256x128xf32>
    tpu.vector_store %arg4[%c0_14, %c0_15], %29 {strides = array<i32>} : memref<256x256xf32, #tpu.memory_space<vmem>>, vector<256x128xf32>,
    %31 = vector.broadcast %5 : vector<1x128xf32> to vector<256x128xf32>
    %32 = arith.subf %2, %31 : vector<256x128xf32>
    %33 = arith.mulf %32, %32 : vector<256x128xf32>
    %34 = vector.broadcast %17 : vector<1x128xf32> to vector<256x128xf32>
    %35 = arith.mulf %33, %34 : vector<256x128xf32>
    %36 = math.log1p %35 : vector<256x128xf32>
    %37 = vector.broadcast %22 : vector<1x128xf32> to vector<256x128xf32>
    %38 = arith.subf %37, %36 : vector<256x128xf32>
    %c0_16 = arith.constant 0 : index
    %c128 = arith.constant 128 : index
    %39 = vector.load %arg4[%c0_16, %c128] : memref<256x256xf32, #tpu.memory_space<vmem>>, vector<256x128xf32>
    tpu.vector_store %arg4[%c0_16, %c128], %38 {strides = array<i32>} : memref<256x256xf32, #tpu.memory_space<vmem>>, vector<256x128xf32>,
    return
  }
  func.func @transform_0(%arg0: i32) -> (i32, i32) {
    %c0_i32 = arith.constant 0 : i32
    %c0_i32_0 = arith.constant 0 : i32
    return %arg0, %c0_i32 : i32, i32
  }
  func.func @transform_1(%arg0: i32) -> (i32, i32) {
    %c0_i32 = arith.constant 0 : i32
    %c0_i32_0 = arith.constant 0 : i32
    %c0_i32_1 = arith.constant 0 : i32
    return %c0_i32, %c0_i32_0 : i32, i32
  }
  func.func @transform_2(%arg0: i32) -> (i32, i32) {
    %c0_i32 = arith.constant 0 : i32
    %c0_i32_0 = arith.constant 0 : i32
    %c0_i32_1 = arith.constant 0 : i32
    return %c0_i32, %c0_i32_0 : i32, i32
  }
  func.func @transform_3(%arg0: i32) -> (i32, i32) {
    %c0_i32 = arith.constant 0 : i32
    %c0_i32_0 = arith.constant 0 : i32
    return %arg0, %c0_i32 : i32, i32
  }
}

</mosaic_0001>

<llo_original>
// kernel: tpu_custom_call.1
$region0: #{tpu_custom_call.1}
  #allocation0 [shape = 'u32[]', space=smem, size = 0x4, offset = 0x4, fixed_abs, tag = 'smem constant byte address 0x4 - core index']
  #allocation1 [shape = 'u32[144,128]{1,0:T(1,128)}', space=vmem, size = 0x12000, scoped, tag = 'internal scratch']
  %s0 = inlined_call_operand.vmem [shape: f32[512,16], index: 0, kind: input, shape index: {}]
  %s1 = inlined_call_operand.vmem [shape: f32[16,128], index: 1, kind: input, shape index: {}]
  %s2 = inlined_call_operand.vmem [shape: f32[8,128], index: 2, kind: input, shape index: {}]
  %s3 = inlined_call_operand.hbm [shape: f32[512,256], index: 3, kind: output, shape index: {}]
  %s4 = sld [smem:[#allocation0]]
  $region45: #{tpu_custom_call.1} parent=0
    _
  %s6 = ssub.s32 1, %s4
  %s7 = scalar_select 0, %s6, %s4
  $region1: #{tpu_custom_call.1} parent=0
    #allocation2 [shape = 'u8[524288]{0}', space=vmem, size = 0x80000, scoped, tag = 'output window, operand 0']
    #allocation3 [shape = 's32[2]{0}', space=sflag, size = 0x8, scoped, tag = 'scoped memory for tpu_custom_call.1']
    %8 = vsyncpa [#allocation3], 0
    %s9 = scalar_lea.sflag [#allocation3], 1
    %10 = vsyncpa %s9, 0
    loop: start=0, step=1, limit=4
    $region2: #{tpu_custom_call.1} parent=1 // loop_pre_header
      _
    $region3: #{tpu_custom_call.1} parent=1 // loop_header
      %s12 = sphi 0, %s16
      %p13 = scmp.ge.s32.totalorder %s12, 4
      %s22 = sphi 0, %s24
      %s25 = sphi 0, %s22
      %s26 = sphi 0, %s25
      %s42 = sphi 0, %s26
      %s46 = sphi 0, %s46
      %s48 = sphi 0, %s46
      %s49 = sphi 0, %s48
      %s63 = sphi 0, %s49
      %s67 = sphi 0, %s67
      %s69 = sphi 0, %s67
      %s70 = sphi 0, %s69
      %s84 = sphi 0, %s70
      %s90 = sphi 0, %s92
      %s93 = sphi 0, %s90
      %s94 = sphi 0, %s93
      %s110 = sphi 0, %s94
    $region4: #{tpu_custom_call.1} parent=1 // loop_header_branch
      %15 = sbr.rel (%p13) target = $region8
    $region5: #{tpu_custom_call.1} parent=1 // loop_body
      %s17 = ssub.s32 %s12, 1
      %s18 = ssub.s32 %s12, 2
      %s19 = sadd.s32 %s12, 1
      %s20 = ssub.s32 %s12, %s19
      %p21 = scmp.eq.s32.totalorder %s20, 0
      %s23 = sadd.s32 %s22, 1
      %s24 = scalar_select %p21, %s22, %s23
      %p27 = pneg %p21
      %p28 = scmp.eq.s32.totalorder %s12, 1
      %p29 = por %p27, %p28
      %p30 = scmp.ne.s32.totalorder %s22, %s25
      %p31 = scmp.eq.s32.totalorder %s12, 0
      %p32 = por %p30, %p31
      %p33 = scmp.ne.s32.totalorder %s22, %s25
      %p34 = scmp.eq.s32.totalorder %s17, 1
      %p35 = por %p33, %p34
      %p36 = scmp.ne.s32.totalorder %s25, %s26
      %p37 = scmp.eq.s32.totalorder %s17, 0
      %p38 = por %p36, %p37
      %p39 = scmp.ne.s32.totalorder %s25, %s26
      %p40 = scmp.eq.s32.totalorder %s18, 1
      %p41 = por %p39, %p40
      %p43 = scmp.ne.s32.totalorder %s26, %s42
      %p44 = scmp.eq.s32.totalorder %s18, 0
      %p45 = por %p43, %p44
      %s47 = sadd.s32 %s46, 1
      %p50 = scmp.eq.s32.totalorder %s12, 1
      %p51 = scmp.ne.s32.totalorder %s46, %s48
      %p52 = scmp.eq.s32.totalorder %s12, 0
      %p53 = por %p51, %p52
      %p54 = scmp.ne.s32.totalorder %s46, %s48
      %p55 = scmp.eq.s32.totalorder %s17, 1
      %p56 = por %p54, %p55
      %p57 = scmp.ne.s32.totalorder %s48, %s49
      %p58 = scmp.eq.s32.totalorder %s17, 0
      %p59 = por %p57, %p58
      %p60 = scmp.ne.s32.totalorder %s48, %s49
      %p61 = scmp.eq.s32.totalorder %s18, 1
      %p62 = por %p60, %p61
      %p64 = scmp.ne.s32.totalorder %s49, %s63
      %p65 = scmp.eq.s32.totalorder %s18, 0
      %p66 = por %p64, %p65
      %s68 = sadd.s32 %s67, 1
      %p71 = scmp.eq.s32.totalorder %s12, 1
      %p72 = scmp.ne.s32.totalorder %s67, %s69
      %p73 = scmp.eq.s32.totalorder %s12, 0
      %p74 = por %p72, %p73
      %p75 = scmp.ne.s32.totalorder %s67, %s69
      %p76 = scmp.eq.s32.totalorder %s17, 1
      %p77 = por %p75, %p76
      %p78 = scmp.ne.s32.totalorder %s69, %s70
      %p79 = scmp.eq.s32.totalorder %s17, 0
      %p80 = por %p78, %p79
      %p81 = scmp.ne.s32.totalorder %s69, %s70
      %p82 = scmp.eq.s32.totalorder %s18, 1
      %p83 = por %p81, %p82
      %p85 = scmp.ne.s32.totalorder %s70, %s84
      %p86 = scmp.eq.s32.totalorder %s18, 0
      %p87 = por %p85, %p86
      %s88 = ssub.s32 %s12, %s19
      %p89 = scmp.eq.s32.totalorder %s88, 0
      %s91 = sadd.s32 %s90, 1
      %s92 = scalar_select %p89, %s90, %s91
      %p95 = pneg %p89
      %p96 = scmp.eq.s32.totalorder %s12, 1
      %p97 = por %p95, %p96
      %p98 = scmp.ne.s32.totalorder %s90, %s93
      %p99 = scmp.eq.s32.totalorder %s12, 0
      %p100 = por %p98, %p99
      %p101 = scmp.ne.s32.totalorder %s90, %s93
      %p102 = scmp.eq.s32.totalorder %s17, 1
      %p103 = por %p101, %p102
      %p104 = scmp.ne.s32.totalorder %s93, %s94
      %p105 = scmp.eq.s32.totalorder %s17, 0
      %p106 = por %p104, %p105
      %p107 = scmp.ne.s32.totalorder %s93, %s94
      %p108 = scmp.eq.s32.totalorder %s18, 1
      %p109 = por %p107, %p108
      %p111 = scmp.ne.s32.totalorder %s94, %s110
      %p112 = scmp.eq.s32.totalorder %s18, 0
      %p113 = por %p111, %p112
      %p114 = scmp.le.s32.totalorder 1, %s12
      %p115 = scmp.lt.s32.totalorder %s12, 3
      %p116 = pnand %p114, %p115
      %p117 = pneg %p116
      // Predicated region
      $region9: #{tpu_custom_call.1} parent=5 // pred_check
        _
      $region10: #{tpu_custom_call.1} parent=5 // pred_check_branch
        %119 = sbr.rel (%p116) target = $region12
      $region11: #{tpu_custom_call.1} parent=5 // pred_region
        %s120 = ssub.s32 %s12, 1
        // Predicated region
        $region13: #{tpu_custom_call.1} parent=11 // pred_check
          %p121 = pneg %p59
        $region14: #{tpu_custom_call.1} parent=11 // pred_check_branch
          %123 = sbr.rel (%p121) target = $region16
        $region15: #{tpu_custom_call.1} parent=11 // pred_region
          _
        $region16: #{tpu_custom_call.1} parent=11 // pred_fallthru
          _
        // Predicated region
        $region17: #{tpu_custom_call.1} parent=11 // pred_check
          %p124 = pneg %p80
        $region18: #{tpu_custom_call.1} parent=11 // pred_check_branch
          %126 = sbr.rel (%p124) target = $region20
        $region19: #{tpu_custom_call.1} parent=11 // pred_region
          _
        $region20: #{tpu_custom_call.1} parent=11 // pred_fallthru
          _
      $region12: #{tpu_custom_call.1} parent=5 // pred_fallthru
        _
      %p127 = scmp.lt.s32.totalorder %s12, 2
      // Predicated region
      $region21: #{tpu_custom_call.1} parent=5 // pred_check
        %p128 = pneg %p127
      $region22: #{tpu_custom_call.1} parent=5 // pred_check_branch
        %130 = sbr.rel (%p128) target = $region24
      $region23: #{tpu_custom_call.1} parent=5 // pred_region
        // Predicated region
        $region25: #{tpu_custom_call.1} parent=23 // pred_check
          %p131 = pneg %p32
        $region26: #{tpu_custom_call.1} parent=23 // pred_check_branch
          %133 = sbr.rel (%p131) target = $region28
        $region27: #{tpu_custom_call.1} parent=23 // pred_region
          %s134 = smul.u32 32, %s12
          %p135 = scmp.lt.s32.totalorder %s134, 63
          %s136 = scalar_select %p135, %s134, 63
          %s137 = smul.addr %s136, 8
          %s138 = scalar_lea.vmem %s0, %s137
          %s139 = smul.u32 32, %s12
        $region28: #{tpu_custom_call.1} parent=23 // pred_fallthru
          _
      $region24: #{tpu_custom_call.1} parent=5 // pred_fallthru
        _
      %p140 = scmp.le.s32.totalorder 1, %s12
      %p141 = scmp.lt.s32.totalorder %s12, 3
      %p142 = pnand %p140, %p141
      %p143 = pneg %p142
      // Predicated region
      $region29: #{tpu_custom_call.1} parent=5 // pred_check
        _
      $region30: #{tpu_custom_call.1} parent=5 // pred_check_branch
        %145 = sbr.rel (%p142) target = $region32
      $region31: #{tpu_custom_call.1} parent=5 // pred_region
        %s146 = ssub.s32 %s12, 1
        %s147 = smul.u32 32, %s17
        %p148 = scmp.lt.s32.totalorder %s147, 63
        %s149 = scalar_select %p148, %s147, 63
        %s150 = smul.addr %s149, 8
        %s151 = scalar_lea.vmem %s0, %s150
        %p152 = pneg %p38
        %p153 = pneg %p35
        %p154 = pneg %p59
        %p155 = pneg %p56
        %p156 = pneg %p80
        %p157 = pneg %p77
        %p158 = pneg %p106
        %p159 = pneg %p103
        %s160 = sand.u32 %s93, 1
        %s161 = scalar_lea.sflag [#allocation3], %s160
        %s162 = sand.u32 %s93, 1
        %s163 = smul.addr %s162, 512
        %s164 = scalar_lea.vmem [#allocation2], %s163
        %s165 = smul.u32 32, %s17
        %p166 = scmp.lt.s32.totalorder %s165, 63
        %s167 = scalar_select %p166, %s165, 63
        %s168 = smul.addr %s167, 8
        %s169 = scalar_lea.vmem %s0, %s168
        %s170 = smul.u32 32, %s17
        %s171 = smul.u32 32, %s17
        %v172 = vld [vmem:[%s169] sm:$0xff]
        %v173 = vld [vmem:[%s169 + $0x8] sm:$0xff]
        %v174 = vld [vmem:[%s169 + $0x10] sm:$0xff]
        %v175 = vld [vmem:[%s169 + $0x18] sm:$0xff]
        %v176 = vld [vmem:[%s169 + $0x20] sm:$0xff]
        %v177 = vld [vmem:[%s169 + $0x28] sm:$0xff]
        %v178 = vld [vmem:[%s169 + $0x30] sm:$0xff]
        %v179 = vld [vmem:[%s169 + $0x38] sm:$0xff]
        %v180 = vld [vmem:[%s169 + $0x40] sm:$0xff]
        %v181 = vld [vmem:[%s169 + $0x48] sm:$0xff]
        %v182 = vld [vmem:[%s169 + $0x50] sm:$0xff]
        %v183 = vld [vmem:[%s169 + $0x58] sm:$0xff]
        %v184 = vld [vmem:[%s169 + $0x60] sm:$0xff]
        %v185 = vld [vmem:[%s169 + $0x68] sm:$0xff]
        %v186 = vld [vmem:[%s169 + $0x70] sm:$0xff]
        %v187 = vld [vmem:[%s169 + $0x78] sm:$0xff]
        %v188 = vld [vmem:[%s169 + $0x80] sm:$0xff]
        %v189 = vld [vmem:[%s169 + $0x88] sm:$0xff]
        %v190 = vld [vmem:[%s169 + $0x90] sm:$0xff]
        %v191 = vld [vmem:[%s169 + $0x98] sm:$0xff]
        %v192 = vld [vmem:[%s169 + $0xa0] sm:$0xff]
        %v193 = vld [vmem:[%s169 + $0xa8] sm:$0xff]
        %v194 = vld [vmem:[%s169 + $0xb0] sm:$0xff]
        %v195 = vld [vmem:[%s169 + $0xb8] sm:$0xff]
        %v196 = vld [vmem:[%s169 + $0xc0] sm:$0xff]
        %v197 = vld [vmem:[%s169 + $0xc8] sm:$0xff]
        %v198 = vld [vmem:[%s169 + $0xd0] sm:$0xff]
        %v199 = vld [vmem:[%s169 + $0xd8] sm:$0xff]
        %v200 = vld [vmem:[%s169 + $0xe0] sm:$0xff]
        %v201 = vld [vmem:[%s169 + $0xe8] sm:$0xff]
        %v202 = vld [vmem:[%s169 + $0xf0] sm:$0xff]
        %v203 = vld [vmem:[%s169 + $0xf8] sm:$0xff]
        %v204 = vld [vmem:[%s1] sm:$0xff]
        %v205 = vld [vmem:[%s1 + $0x8] sm:$0xff]
        %vm206 = vcmask 130048
        %v208 = vsel %vm206, %v172, 0
        %v211 = vsel %vm206, %v173, 0
        %v214 = vsel %vm206, %v174, 0
        %v217 = vsel %vm206, %v175, 0
        %v220 = vsel %vm206, %v176, 0
        %v223 = vsel %vm206, %v177, 0
        %v226 = vsel %vm206, %v178, 0
        %v229 = vsel %vm206, %v179, 0
        %v232 = vsel %vm206, %v180, 0
        %v235 = vsel %vm206, %v181, 0
        %v238 = vsel %vm206, %v182, 0
        %v241 = vsel %vm206, %v183, 0
        %v244 = vsel %vm206, %v184, 0
        %v247 = vsel %vm206, %v185, 0
        %v250 = vsel %vm206, %v186, 0
        %v253 = vsel %vm206, %v187, 0
        %v256 = vsel %vm206, %v188, 0
        %v259 = vsel %vm206, %v189, 0
        %v262 = vsel %vm206, %v190, 0
        %v265 = vsel %vm206, %v191, 0
        %v268 = vsel %vm206, %v192, 0
        %v271 = vsel %vm206, %v193, 0
        %v274 = vsel %vm206, %v194, 0
        %v277 = vsel %vm206, %v195, 0
        %v280 = vsel %vm206, %v196, 0
        %v283 = vsel %vm206, %v197, 0
        %v286 = vsel %vm206, %v198, 0
        %v289 = vsel %vm206, %v199, 0
        %v292 = vsel %vm206, %v200, 0
        %v295 = vsel %vm206, %v201, 0
        %v298 = vsel %vm206, %v202, 0
        %v301 = vsel %vm206, %v203, 0
        %303 = vmatprep.subr.mxu0 0.0
        %304 = vmatpush1.msra.mxu0 %v204
        %305 = vmatprep.subr.mxu0 0.0
        %306 = vmatpush1.msra.mxu0 %v205
        %307 = vmatprep.subr.mxu0 0.0
        %308 = vmatpush1.msra.mxu0 0.0
        %309 = vmatprep.subr.mxu0 0.0
        %310 = vmatpush1.msra.mxu0 0.0
        %311 = vmatprep.subr.mxu0 0.0
        %312 = vmatpush1.msra.mxu0 0.0
        %313 = vmatprep.subr.mxu0 0.0
        %314 = vmatpush1.msra.mxu0 0.0
        %315 = vmatprep.subr.mxu0 0.0
        %316 = vmatpush1.msra.mxu0 0.0
        %317 = vmatprep.subr.mxu0 0.0
        %318 = vmatpush1.msra.mxu0 0.0
        %319 = vmatprep.subr.mxu0 0.0
        %320 = vmatpush1.msra.mxu0 0.0
        %321 = vmatprep.subr.mxu0 0.0
        %322 = vmatpush1.msra.mxu0 0.0
        %323 = vmatprep.subr.mxu0 0.0
        %324 = vmatpush1.msra.mxu0 0.0
        %325 = vmatprep.subr.mxu0 0.0
        %326 = vmatpush1.msra.mxu0 0.0
        %327 = vmatprep.subr.mxu0 0.0
        %328 = vmatpush1.msra.mxu0 0.0
        %329 = vmatprep.subr.mxu0 0.0
        %330 = vmatpush1.msra.mxu0 0.0
        %331 = vmatprep.subr.mxu0 0.0
        %332 = vmatpush1.msra.mxu0 0.0
        %333 = vmatprep.subr.mxu0 0.0
        %334 = vmatpush1.msra.mxu0 0.0
        %335 = vmatprep.subr.mxu0 0.0
        %336 = vmatpush1.msra.mxu0 0.0
        %337 = vmatprep.subr.mxu0 0.0
        %338 = vmatpush1.msra.mxu0 0.0
        %339 = vmatprep.subr.mxu0 0.0
        %340 = vmatpush1.msra.mxu0 0.0
        %341 = vmatprep.subr.mxu0 0.0
        %342 = vmatpush1.msra.mxu0 0.0
        %343 = vmatprep.subr.mxu0 0.0
        %344 = vmatpush1.msra.mxu0 0.0
        %345 = vmatprep.subr.mxu0 0.0
        %346 = vmatpush1.msra.mxu0 0.0
        %347 = vmatprep.subr.mxu0 0.0
        %348 = vmatpush1.msra.mxu0 0.0
        %349 = vmatprep.subr.mxu0 0.0
        %350 = vmatpush1.msra.mxu0 0.0
        %351 = vmatprep.subr.mxu0 0.0
        %352 = vmatpush1.msra.mxu0 0.0
        %353 = vmatprep.subr.mxu0 0.0
        %354 = vmatpush1.msra.mxu0 0.0
        %355 = vmatprep.subr.mxu0 0.0
        %356 = vmatpush1.msra.mxu0 0.0
        %357 = vmatprep.subr.mxu0 0.0
        %358 = vmatpush1.msra.mxu0 0.0
        %359 = vmatprep.subr.mxu0 0.0
        %360 = vmatpush1.msra.mxu0 0.0
        %361 = vmatprep.subr.mxu0 0.0
        %362 = vmatpush1.msra.mxu0 0.0
        %363 = vmatprep.subr.mxu0 0.0
        %364 = vmatpush1.msra.mxu0 0.0
        %365 = vmatprep.subr.mxu0 0.0
        %366 = vmatpush1.msra.mxu0 0.0
        %367 = vmatprep.mubr.f32.mxu0 0.0
        %368 = vmatmul.mubr.f32.gmra.mrb[0].mxu0 %v208
        %v369 = vpop.f32.mrb[0].mxu0
        %v370 = vadd.f32 0.0, %v369
        %v371 = vpop.f32.mrb[0].mxu0
        %372 = vmatprep.mubr.f32.mxu0 0.0
        %373 = vmatmul.mubr.f32.gmra.mrb[0].mxu0 %v211
        %v374 = vpop.f32.mrb[0].mxu0
        %v375 = vadd.f32 0.0, %v374
        %v376 = vpop.f32.mrb[0].mxu0
        %377 = vmatprep.mubr.f32.mxu0 0.0
        %378 = vmatmul.mubr.f32.gmra.mrb[0].mxu0 %v214
        %v379 = vpop.f32.mrb[0].mxu0
        %v380 = vadd.f32 0.0, %v379
        %v381 = vpop.f32.mrb[0].mxu0
        %382 = vmatprep.mubr.f32.mxu0 0.0
        %383 = vmatmul.mubr.f32.gmra.mrb[0].mxu0 %v217
        %v384 = vpop.f32.mrb[0].mxu0
        %v385 = vadd.f32 0.0, %v384
        %v386 = vpop.f32.mrb[0].mxu0
        %387 = vmatprep.mubr.f32.mxu0 0.0
        %388 = vmatmul.mubr.f32.gmra.mrb[0].mxu0 %v220
        %v389 = vpop.f32.mrb[0].mxu0
        %v390 = vadd.f32 0.0, %v389
        %v391 = vpop.f32.mrb[0].mxu0
        %392 = vmatprep.mubr.f32.mxu0 0.0
        %393 = vmatmul.mubr.f32.gmra.mrb[0].mxu0 %v223
        %v394 = vpop.f32.mrb[0].mxu0
        %v395 = vadd.f32 0.0, %v394
        %v396 = vpop.f32.mrb[0].mxu0
        %397 = vmatprep.mubr.f32.mxu0 0.0
        %398 = vmatmul.mubr.f32.gmra.mrb[0].mxu0 %v226
        %v399 = vpop.f32.mrb[0].mxu0
        %v400 = vadd.f32 0.0, %v399
        %v401 = vpop.f32.mrb[0].mxu0
        %402 = vmatprep.mubr.f32.mxu0 0.0
        %403 = vmatmul.mubr.f32.gmra.mrb[0].mxu0 %v229
        %v404 = vpop.f32.mrb[0].mxu0
        %v405 = vadd.f32 0.0, %v404
        %v406 = vpop.f32.mrb[0].mxu0
        %407 = vmatprep.mubr.f32.mxu0 0.0
        %408 = vmatmul.mubr.f32.gmra.mrb[0].mxu0 %v232
        %v409 = vpop.f32.mrb[0].mxu0
        %v410 = vadd.f32 0.0, %v409
        %v411 = vpop.f32.mrb[0].mxu0
        %412 = vmatprep.mubr.f32.mxu0 0.0
        %413 = vmatmul.mubr.f32.gmra.mrb[0].mxu0 %v235
        %v414 = vpop.f32.mrb[0].mxu0
        %v415 = vadd.f32 0.0, %v414
        %v416 = vpop.f32.mrb[0].mxu0
        %417 = vmatprep.mubr.f32.mxu0 0.0
        %418 = vmatmul.mubr.f32.gmra.mrb[0].mxu0 %v238
        %v419 = vpop.f32.mrb[0].mxu0
        %v420 = vadd.f32 0.0, %v419
        %v421 = vpop.f32.mrb[0].mxu0
        %422 = vmatprep.mubr.f32.mxu0 0.0
        %423 = vmatmul.mubr.f32.gmra.mrb[0].mxu0 %v241
        %v424 = vpop.f32.mrb[0].mxu0
        %v425 = vadd.f32 0.0, %v424
        %v426 = vpop.f32.mrb[0].mxu0
        %427 = vmatprep.mubr.f32.mxu0 0.0
        %428 = vmatmul.mubr.f32.gmra.mrb[0].mxu0 %v244
        %v429 = vpop.f32.mrb[0].mxu0
        %v430 = vadd.f32 0.0, %v429
        %v431 = vpop.f32.mrb[0].mxu0
        %432 = vmatprep.mubr.f32.mxu0 0.0
        %433 = vmatmul.mubr.f32.gmra.mrb[0].mxu0 %v247
        %v434 = vpop.f32.mrb[0].mxu0
        %v435 = vadd.f32 0.0, %v434
        %v436 = vpop.f32.mrb[0].mxu0
        %437 = vmatprep.mubr.f32.mxu0 0.0
        %438 = vmatmul.mubr.f32.gmra.mrb[0].mxu0 %v250
        %v439 = vpop.f32.mrb[0].mxu0
        %v440 = vadd.f32 0.0, %v439
        %v441 = vpop.f32.mrb[0].mxu0
        %442 = vmatprep.mubr.f32.mxu0 0.0
        %443 = vmatmul.mubr.f32.gmra.mrb[0].mxu0 %v253
        %v444 = vpop.f32.mrb[0].mxu0
        %v445 = vadd.f32 0.0, %v444
        %v446 = vpop.f32.mrb[0].mxu0
        %447 = vmatprep.mubr.f32.mxu0 0.0
        %448 = vmatmul.mubr.f32.gmra.mrb[0].mxu0 %v256
        %v449 = vpop.f32.mrb[0].mxu0
        %v450 = vadd.f32 0.0, %v449
        %v451 = vpop.f32.mrb[0].mxu0
        %452 = vmatprep.mubr.f32.mxu0 0.0
        %453 = vmatmul.mubr.f32.gmra.mrb[0].mxu0 %v259
        %v454 = vpop.f32.mrb[0].mxu0
        %v455 = vadd.f32 0.0, %v454
        %v456 = vpop.f32.mrb[0].mxu0
        %457 = vmatprep.mubr.f32.mxu0 0.0
        %458 = vmatmul.mubr.f32.gmra.mrb[0].mxu0 %v262
        %v459 = vpop.f32.mrb[0].mxu0
        %v460 = vadd.f32 0.0, %v459
        %v461 = vpop.f32.mrb[0].mxu0
        %462 = vmatprep.mubr.f32.mxu0 0.0
        %463 = vmatmul.mubr.f32.gmra.mrb[0].mxu0 %v265
        %v464 = vpop.f32.mrb[0].mxu0
        %v465 = vadd.f32 0.0, %v464
        %v466 = vpop.f32.mrb[0].mxu0
        %467 = vmatprep.mubr.f32.mxu0 0.0
        %468 = vmatmul.mubr.f32.gmra.mrb[0].mxu0 %v268
        %v469 = vpop.f32.mrb[0].mxu0
        %v470 = vadd.f32 0.0, %v469
        %v471 = vpop.f32.mrb[0].mxu0
        %472 = vmatprep.mubr.f32.mxu0 0.0
        %473 = vmatmul.mubr.f32.gmra.mrb[0].mxu0 %v271
        %v474 = vpop.f32.mrb[0].mxu0
        %v475 = vadd.f32 0.0, %v474
        %v476 = vpop.f32.mrb[0].mxu0
        %477 = vmatprep.mubr.f32.mxu0 0.0
        %478 = vmatmul.mubr.f32.gmra.mrb[0].mxu0 %v274
        %v479 = vpop.f32.mrb[0].mxu0
        %v480 = vadd.f32 0.0, %v479
        %v481 = vpop.f32.mrb[0].mxu0
        %482 = vmatprep.mubr.f32.mxu0 0.0
        %483 = vmatmul.mubr.f32.gmra.mrb[0].mxu0 %v277
        %v484 = vpop.f32.mrb[0].mxu0
        %v485 = vadd.f32 0.0, %v484
        %v486 = vpop.f32.mrb[0].mxu0
        %487 = vmatprep.mubr.f32.mxu0 0.0
        %488 = vmatmul.mubr.f32.gmra.mrb[0].mxu0 %v280
        %v489 = vpop.f32.mrb[0].mxu0
        %v490 = vadd.f32 0.0, %v489
        %v491 = vpop.f32.mrb[0].mxu0
        %492 = vmatprep.mubr.f32.mxu0 0.0
        %493 = vmatmul.mubr.f32.gmra.mrb[0].mxu0 %v283
        %v494 = vpop.f32.mrb[0].mxu0
        %v495 = vadd.f32 0.0, %v494
        %v496 = vpop.f32.mrb[0].mxu0
        %497 = vmatprep.mubr.f32.mxu0 0.0
        %498 = vmatmul.mubr.f32.gmra.mrb[0].mxu0 %v286
        %v499 = vpop.f32.mrb[0].mxu0
        %v500 = vadd.f32 0.0, %v499
        %v501 = vpop.f32.mrb[0].mxu0
        %502 = vmatprep.mubr.f32.mxu0 0.0
        %503 = vmatmul.mubr.f32.gmra.mrb[0].mxu0 %v289
        %v504 = vpop.f32.mrb[0].mxu0
        %v505 = vadd.f32 0.0, %v504
        %v506 = vpop.f32.mrb[0].mxu0
        %507 = vmatprep.mubr.f32.mxu0 0.0
        %508 = vmatmul.mubr.f32.gmra.mrb[0].mxu0 %v292
        %v509 = vpop.f32.mrb[0].mxu0
        %v510 = vadd.f32 0.0, %v509
        %v511 = vpop.f32.mrb[0].mxu0
        %512 = vmatprep.mubr.f32.mxu0 0.0
        %513 = vmatmul.mubr.f32.gmra.mrb[0].mxu0 %v295
        %v514 = vpop.f32.mrb[0].mxu0
        %v515 = vadd.f32 0.0, %v514
        %v516 = vpop.f32.mrb[0].mxu0
        %517 = vmatprep.mubr.f32.mxu0 0.0
        %518 = vmatmul.mubr.f32.gmra.mrb[0].mxu0 %v298
        %v519 = vpop.f32.mrb[0].mxu0
        %v520 = vadd.f32 0.0, %v519
        %v521 = vpop.f32.mrb[0].mxu0
        %522 = vmatprep.mubr.f32.mxu0 0.0
        %523 = vmatmul.mubr.f32.gmra.mrb[0].mxu0 %v301
        %v524 = vpop.f32.mrb[0].mxu0
        %v525 = vadd.f32 0.0, %v524
        %v526 = vpop.f32.mrb[0].mxu0
        %527 = vdwg.mxu0
        %v528 = vld [vmem:[%s2] sm:$0x1]
        %v529 = vld [vmem:[%s2 + $0x1] sm:$0x1]
        %v530 = vld [vmem:[%s2 + $0x2] sm:$0x1]
        %v531 = vld [vmem:[%s2 + $0x3] sm:$0x1]
        %v532 = vmul.f32 %v529, %v529
        %v533 = vrcp.pop %v532
        %v534 = vmul.f32 -0.5, %v533
        %v535 = vmul.f32 %v532, 6.2831855
        %v536 = vlog2.pop %v535
        %v537 = vmul.f32 %v536, 0.6931472
        %v538 = vmul.f32 %v537, -0.5
        %v539 = vmul.f32 %v531, %v531
        %v540 = vrcp.pop %v539
        %v541 = vmul.f32 1.0, %v540
        %v542 = vmul.f32 %v531, 3.1415927
        %v543 = vlog2.pop %v542
        %v544 = vmul.f32 %v543, 0.6931472
        %v545 = vsub.f32 0.0, %v544
        %v546 = vlaneseq
        %v547 = vshrl.u32 %v546, 7
        %v548 = vsub.s32 0, %v547
        %v549 = vrot.slane %v528, %v548
        %v550 = vsub.f32 %v370, %v549
        %v551 = vsub.f32 %v375, %v549
        %v552 = vsub.f32 %v380, %v549
        %v553 = vsub.f32 %v385, %v549
        %v554 = vsub.f32 %v390, %v549
        %v555 = vsub.f32 %v395, %v549
        %v556 = vsub.f32 %v400, %v549
        %v557 = vsub.f32 %v405, %v549
        %v558 = vsub.f32 %v410, %v549
        %v559 = vsub.f32 %v415, %v549
        %v560 = vsub.f32 %v420, %v549
        %v561 = vsub.f32 %v425, %v549
        %v562 = vsub.f32 %v430, %v549
        %v563 = vsub.f32 %v435, %v549
        %v564 = vsub.f32 %v440, %v549
        %v565 = vsub.f32 %v445, %v549
        %v566 = vsub.f32 %v450, %v549
        %v567 = vsub.f32 %v455, %v549
        %v568 = vsub.f32 %v460, %v549
        %v569 = vsub.f32 %v465, %v549
        %v570 = vsub.f32 %v470, %v549
        %v571 = vsub.f32 %v475, %v549
        %v572 = vsub.f32 %v480, %v549
        %v573 = vsub.f32 %v485, %v549
        %v574 = vsub.f32 %v490, %v549
        %v575 = vsub.f32 %v495, %v549
        %v576 = vsub.f32 %v500, %v549
        %v577 = vsub.f32 %v505, %v549
        %v578 = vsub.f32 %v510, %v549
        %v579 = vsub.f32 %v515, %v549
        %v580 = vsub.f32 %v520, %v549
        %v581 = vsub.f32 %v525, %v549
        %v582 = vmul.f32 %v550, %v550
        %v583 = vmul.f32 %v551, %v551
        %v584 = vmul.f32 %v552, %v552
        %v585 = vmul.f32 %v553, %v553
        %v586 = vmul.f32 %v554, %v554
        %v587 = vmul.f32 %v555, %v555
        %v588 = vmul.f32 %v556, %v556
        %v589 = vmul.f32 %v557, %v557
        %v590 = vmul.f32 %v558, %v558
        %v591 = vmul.f32 %v559, %v559
        %v592 = vmul.f32 %v560, %v560
        %v593 = vmul.f32 %v561, %v561
        %v594 = vmul.f32 %v562, %v562
        %v595 = vmul.f32 %v563, %v563
        %v596 = vmul.f32 %v564, %v564
        %v597 = vmul.f32 %v565, %v565
        %v598 = vmul.f32 %v566, %v566
        %v599 = vmul.f32 %v567, %v567
        %v600 = vmul.f32 %v568, %v568
        %v601 = vmul.f32 %v569, %v569
        %v602 = vmul.f32 %v570, %v570
        %v603 = vmul.f32 %v571, %v571
        %v604 = vmul.f32 %v572, %v572
        %v605 = vmul.f32 %v573, %v573
        %v606 = vmul.f32 %v574, %v574
        %v607 = vmul.f32 %v575, %v575
        %v608 = vmul.f32 %v576, %v576
        %v609 = vmul.f32 %v577, %v577
        %v610 = vmul.f32 %v578, %v578
        %v611 = vmul.f32 %v579, %v579
        %v612 = vmul.f32 %v580, %v580
        %v613 = vmul.f32 %v581, %v581
        %v614 = vlaneseq
        %v615 = vshrl.u32 %v614, 7
        %v616 = vsub.s32 0, %v615
        %v617 = vrot.slane %v534, %v616
        %v618 = vmul.f32 %v582, %v617
        %v619 = vmul.f32 %v583, %v617
        %v620 = vmul.f32 %v584, %v617
        %v621 = vmul.f32 %v585, %v617
        %v622 = vmul.f32 %v586, %v617
        %v623 = vmul.f32 %v587, %v617
        %v624 = vmul.f32 %v588, %v617
        %v625 = vmul.f32 %v589, %v617
        %v626 = vmul.f32 %v590, %v617
        %v627 = vmul.f32 %v591, %v617
        %v628 = vmul.f32 %v592, %v617
        %v629 = vmul.f32 %v593, %v617
        %v630 = vmul.f32 %v594, %v617
        %v631 = vmul.f32 %v595, %v617
        %v632 = vmul.f32 %v596, %v617
        %v633 = vmul.f32 %v597, %v617
        %v634 = vmul.f32 %v598, %v617
        %v635 = vmul.f32 %v599, %v617
        %v636 = vmul.f32 %v600, %v617
        %v637 = vmul.f32 %v601, %v617
        %v638 = vmul.f32 %v602, %v617
        %v639 = vmul.f32 %v603, %v617
        %v640 = vmul.f32 %v604, %v617
        %v641 = vmul.f32 %v605, %v617
        %v642 = vmul.f32 %v606, %v617
        %v643 = vmul.f32 %v607, %v617
        %v644 = vmul.f32 %v608, %v617
        %v645 = vmul.f32 %v609, %v617
        %v646 = vmul.f32 %v610, %v617
        %v647 = vmul.f32 %v611, %v617
        %v648 = vmul.f32 %v612, %v617
        %v649 = vmul.f32 %v613, %v617
        %v650 = vlaneseq
        %v651 = vshrl.u32 %v650, 7
        %v652 = vsub.s32 0, %v651
        %v653 = vrot.slane %v538, %v652
        %v654 = vadd.f32 %v653, %v618
        %v655 = vadd.f32 %v653, %v619
        %v656 = vadd.f32 %v653, %v620
        %v657 = vadd.f32 %v653, %v621
        %v658 = vadd.f32 %v653, %v622
        %v659 = vadd.f32 %v653, %v623
        %v660 = vadd.f32 %v653, %v624
        %v661 = vadd.f32 %v653, %v625
        %v662 = vadd.f32 %v653, %v626
        %v663 = vadd.f32 %v653, %v627
        %v664 = vadd.f32 %v653, %v628
        %v665 = vadd.f32 %v653, %v629
        %v666 = vadd.f32 %v653, %v630
        %v667 = vadd.f32 %v653, %v631
        %v668 = vadd.f32 %v653, %v632
        %v669 = vadd.f32 %v653, %v633
        %v670 = vadd.f32 %v653, %v634
        %v671 = vadd.f32 %v653, %v635
        %v672 = vadd.f32 %v653, %v636
        %v673 = vadd.f32 %v653, %v637
        %v674 = vadd.f32 %v653, %v638
        %v675 = vadd.f32 %v653, %v639
        %v676 = vadd.f32 %v653, %v640
        %v677 = vadd.f32 %v653, %v641
        %v678 = vadd.f32 %v653, %v642
        %v679 = vadd.f32 %v653, %v643
        %v680 = vadd.f32 %v653, %v644
        %v681 = vadd.f32 %v653, %v645
        %v682 = vadd.f32 %v653, %v646
        %v683 = vadd.f32 %v653, %v647
        %v684 = vadd.f32 %v653, %v648
        %v685 = vadd.f32 %v653, %v649
        %686 = vst [vmem:[%s164] sm:$0xff] %v654
        %687 = vst [vmem:[%s164 + $0x10] sm:$0xff] %v655
        %688 = vst [vmem:[%s164 + $0x20] sm:$0xff] %v656
        %689 = vst [vmem:[%s164 + $0x30] sm:$0xff] %v657
        %690 = vst [vmem:[%s164 + $0x40] sm:$0xff] %v658
        %691 = vst [vmem:[%s164 + $0x50] sm:$0xff] %v659
        %692 = vst [vmem:[%s164 + $0x60] sm:$0xff] %v660
        %693 = vst [vmem:[%s164 + $0x70] sm:$0xff] %v661
        %694 = vst [vmem:[%s164 + $0x80] sm:$0xff] %v662
        %695 = vst [vmem:[%s164 + $0x90] sm:$0xff] %v663
        %696 = vst [vmem:[%s164 + $0xa0] sm:$0xff] %v664
        %697 = vst [vmem:[%s164 + $0xb0] sm:$0xff] %v665
        %698 = vst [vmem:[%s164 + $0xc0] sm:$0xff] %v666
        %699 = vst [vmem:[%s164 + $0xd0] sm:$0xff] %v667
        %700 = vst [vmem:[%s164 + $0xe0] sm:$0xff] %v668
        %701 = vst [vmem:[%s164 + $0xf0] sm:$0xff] %v669
        %702 = vst [vmem:[%s164 + $0x100] sm:$0xff] %v670
        %703 = vst [vmem:[%s164 + $0x110] sm:$0xff] %v671
        %704 = vst [vmem:[%s164 + $0x120] sm:$0xff] %v672
        %705 = vst [vmem:[%s164 + $0x130] sm:$0xff] %v673
        %706 = vst [vmem:[%s164 + $0x140] sm:$0xff] %v674
        %707 = vst [vmem:[%s164 + $0x150] sm:$0xff] %v675
        %708 = vst [vmem:[%s164 + $0x160] sm:$0xff] %v676
        %709 = vst [vmem:[%s164 + $0x170] sm:$0xff] %v677
        %710 = vst [vmem:[%s164 + $0x180] sm:$0xff] %v678
        %711 = vst [vmem:[%s164 + $0x190] sm:$0xff] %v679
        %712 = vst [vmem:[%s164 + $0x1a0] sm:$0xff] %v680
        %713 = vst [vmem:[%s164 + $0x1b0] sm:$0xff] %v681
        %714 = vst [vmem:[%s164 + $0x1c0] sm:$0xff] %v682
        %715 = vst [vmem:[%s164 + $0x1d0] sm:$0xff] %v683
        %716 = vst [vmem:[%s164 + $0x1e0] sm:$0xff] %v684
        %717 = vst [vmem:[%s164 + $0x1f0] sm:$0xff] %v685
        %v718 = vlaneseq
        %v719 = vshrl.u32 %v718, 7
        %v720 = vsub.s32 0, %v719
        %v721 = vrot.slane %v530, %v720
        %v722 = vsub.f32 %v370, %v721
        %v723 = vsub.f32 %v375, %v721
        %v724 = vsub.f32 %v380, %v721
        %v725 = vsub.f32 %v385, %v721
        %v726 = vsub.f32 %v390, %v721
        %v727 = vsub.f32 %v395, %v721
        %v728 = vsub.f32 %v400, %v721
        %v729 = vsub.f32 %v405, %v721
        %v730 = vsub.f32 %v410, %v721
        %v731 = vsub.f32 %v415, %v721
        %v732 = vsub.f32 %v420, %v721
        %v733 = vsub.f32 %v425, %v721
        %v734 = vsub.f32 %v430, %v721
        %v735 = vsub.f32 %v435, %v721
        %v736 = vsub.f32 %v440, %v721
        %v737 = vsub.f32 %v445, %v721
        %v738 = vsub.f32 %v450, %v721
        %v739 = vsub.f32 %v455, %v721
        %v740 = vsub.f32 %v460, %v721
        %v741 = vsub.f32 %v465, %v721
        %v742 = vsub.f32 %v470, %v721
        %v743 = vsub.f32 %v475, %v721
        %v744 = vsub.f32 %v480, %v721
        %v745 = vsub.f32 %v485, %v721
        %v746 = vsub.f32 %v490, %v721
        %v747 = vsub.f32 %v495, %v721
        %v748 = vsub.f32 %v500, %v721
        %v749 = vsub.f32 %v505, %v721
        %v750 = vsub.f32 %v510, %v721
        %v751 = vsub.f32 %v515, %v721
        %v752 = vsub.f32 %v520, %v721
        %v753 = vsub.f32 %v525, %v721
        %v754 = vmul.f32 %v722, %v722
        %v755 = vmul.f32 %v723, %v723
        %v756 = vmul.f32 %v724, %v724
        %v757 = vmul.f32 %v725, %v725
        %v758 = vmul.f32 %v726, %v726
        %v759 = vmul.f32 %v727, %v727
        %v760 = vmul.f32 %v728, %v728
        %v761 = vmul.f32 %v729, %v729
        %v762 = vmul.f32 %v730, %v730
        %v763 = vmul.f32 %v731, %v731
        %v764 = vmul.f32 %v732, %v732
        %v765 = vmul.f32 %v733, %v733
        %v766 = vmul.f32 %v734, %v734
        %v767 = vmul.f32 %v735, %v735
        %v768 = vmul.f32 %v736, %v736
        %v769 = vmul.f32 %v737, %v737
        %v770 = vmul.f32 %v738, %v738
        %v771 = vmul.f32 %v739, %v739
        %v772 = vmul.f32 %v740, %v740
        %v773 = vmul.f32 %v741, %v741
        %v774 = vmul.f32 %v742, %v742
        %v775 = vmul.f32 %v743, %v743
        %v776 = vmul.f32 %v744, %v744
        %v777 = vmul.f32 %v745, %v745
        %v778 = vmul.f32 %v746, %v746
        %v779 = vmul.f32 %v747, %v747
        %v780 = vmul.f32 %v748, %v748
        %v781 = vmul.f32 %v749, %v749
        %v782 = vmul.f32 %v750, %v750
        %v783 = vmul.f32 %v751, %v751
        %v784 = vmul.f32 %v752, %v752
        %v785 = vmul.f32 %v753, %v753
        %v786 = vlaneseq
        %v787 = vshrl.u32 %v786, 7
        %v788 = vsub.s32 0, %v787
        %v789 = vrot.slane %v541, %v788
        %v790 = vmul.f32 %v754, %v789
        %v791 = vmul.f32 %v755, %v789
        %v792 = vmul.f32 %v756, %v789
        %v793 = vmul.f32 %v757, %v789
        %v794 = vmul.f32 %v758, %v789
        %v795 = vmul.f32 %v759, %v789
        %v796 = vmul.f32 %v760, %v789
        %v797 = vmul.f32 %v761, %v789
        %v798 = vmul.f32 %v762, %v789
        %v799 = vmul.f32 %v763, %v789
        %v800 = vmul.f32 %v764, %v789
        %v801 = vmul.f32 %v765, %v789
        %v802 = vmul.f32 %v766, %v789
        %v803 = vmul.f32 %v767, %v789
        %v804 = vmul.f32 %v768, %v789
        %v805 = vmul.f32 %v769, %v789
        %v806 = vmul.f32 %v770, %v789
        %v807 = vmul.f32 %v771, %v789
        %v808 = vmul.f32 %v772, %v789
        %v809 = vmul.f32 %v773, %v789
        %v810 = vmul.f32 %v774, %v789
        %v811 = vmul.f32 %v775, %v789
        %v812 = vmul.f32 %v776, %v789
        %v813 = vmul.f32 %v777, %v789
        %v814 = vmul.f32 %v778, %v789
        %v815 = vmul.f32 %v779, %v789
        %v816 = vmul.f32 %v780, %v789
        %v817 = vmul.f32 %v781, %v789
        %v818 = vmul.f32 %v782, %v789
        %v819 = vmul.f32 %v783, %v789
        %v820 = vmul.f32 %v784, %v789
        %v821 = vmul.f32 %v785, %v789
        %v822 = vadd.f32 %v790, 1.0
        %v823 = vlog2.pop %v822
        %v824 = vmul.f32 %v823, 0.6931472
        %v825 = vmul.f32 -0.5, %v790
        %v826 = vadd.f32 %v825, 1.0
        %v827 = vmul.f32 %v826, %v790
        %v828 = vand.u32 2147483647, %v790
        %vm829 = vcmp.lt.f32.partialorder %v828, 0.0004427343
        %v830 = vsel %vm829, %v827, %v824
        %v831 = vadd.f32 %v791, 1.0
        %v832 = vlog2.pop %v831
        %v833 = vmul.f32 %v832, 0.6931472
        %v834 = vmul.f32 -0.5, %v791
        %v835 = vadd.f32 %v834, 1.0
        %v836 = vmul.f32 %v835, %v791
        %v837 = vand.u32 2147483647, %v791
        %vm838 = vcmp.lt.f32.partialorder %v837, 0.0004427343
        %v839 = vsel %vm838, %v836, %v833
        %v840 = vadd.f32 %v792, 1.0
        %v841 = vlog2.pop %v840
        %v842 = vmul.f32 %v841, 0.6931472
        %v843 = vmul.f32 -0.5, %v792
        %v844 = vadd.f32 %v843, 1.0
        %v845 = vmul.f32 %v844, %v792
        %v846 = vand.u32 2147483647, %v792
        %vm847 = vcmp.lt.f32.partialorder %v846, 0.0004427343
        %v848 = vsel %vm847, %v845, %v842
        %v849 = vadd.f32 %v793, 1.0
        %v850 = vlog2.pop %v849
        %v851 = vmul.f32 %v850, 0.6931472
        %v852 = vmul.f32 -0.5, %v793
        %v853 = vadd.f32 %v852, 1.0
        %v854 = vmul.f32 %v853, %v793
        %v855 = vand.u32 2147483647, %v793
        %vm856 = vcmp.lt.f32.partialorder %v855, 0.0004427343
        %v857 = vsel %vm856, %v854, %v851
        %v858 = vadd.f32 %v794, 1.0
        %v859 = vlog2.pop %v858
        %v860 = vmul.f32 %v859, 0.6931472
        %v861 = vmul.f32 -0.5, %v794
        %v862 = vadd.f32 %v861, 1.0
        %v863 = vmul.f32 %v862, %v794
        %v864 = vand.u32 2147483647, %v794
        %vm865 = vcmp.lt.f32.partialorder %v864, 0.0004427343
        %v866 = vsel %vm865, %v863, %v860
        %v867 = vadd.f32 %v795, 1.0
        %v868 = vlog2.pop %v867
        %v869 = vmul.f32 %v868, 0.6931472
        %v870 = vmul.f32 -0.5, %v795
        %v871 = vadd.f32 %v870, 1.0
        %v872 = vmul.f32 %v871, %v795
        %v873 = vand.u32 2147483647, %v795
        %vm874 = vcmp.lt.f32.partialorder %v873, 0.0004427343
        %v875 = vsel %vm874, %v872, %v869
        %v876 = vadd.f32 %v796, 1.0
        %v877 = vlog2.pop %v876
        %v878 = vmul.f32 %v877, 0.6931472
        %v879 = vmul.f32 -0.5, %v796
        %v880 = vadd.f32 %v879, 1.0
        %v881 = vmul.f32 %v880, %v796
        %v882 = vand.u32 2147483647, %v796
        %vm883 = vcmp.lt.f32.partialorder %v882, 0.0004427343
        %v884 = vsel %vm883, %v881, %v878
        %v885 = vadd.f32 %v797, 1.0
        %v886 = vlog2.pop %v885
        %v887 = vmul.f32 %v886, 0.6931472
        %v888 = vmul.f32 -0.5, %v797
        %v889 = vadd.f32 %v888, 1.0
        %v890 = vmul.f32 %v889, %v797
        %v891 = vand.u32 2147483647, %v797
        %vm892 = vcmp.lt.f32.partialorder %v891, 0.0004427343
        %v893 = vsel %vm892, %v890, %v887
        %v894 = vadd.f32 %v798, 1.0
        %v895 = vlog2.pop %v894
        %v896 = vmul.f32 %v895, 0.6931472
        %v897 = vmul.f32 -0.5, %v798
        %v898 = vadd.f32 %v897, 1.0
        %v899 = vmul.f32 %v898, %v798
        %v900 = vand.u32 2147483647, %v798
        %vm901 = vcmp.lt.f32.partialorder %v900, 0.0004427343
        %v902 = vsel %vm901, %v899, %v896
        %v903 = vadd.f32 %v799, 1.0
        %v904 = vlog2.pop %v903
        %v905 = vmul.f32 %v904, 0.6931472
        %v906 = vmul.f32 -0.5, %v799
        %v907 = vadd.f32 %v906, 1.0
        %v908 = vmul.f32 %v907, %v799
        %v909 = vand.u32 2147483647, %v799
        %vm910 = vcmp.lt.f32.partialorder %v909, 0.0004427343
        %v911 = vsel %vm910, %v908, %v905
        %v912 = vadd.f32 %v800, 1.0
        %v913 = vlog2.pop %v912
        %v914 = vmul.f32 %v913, 0.6931472
        %v915 = vmul.f32 -0.5, %v800
        %v916 = vadd.f32 %v915, 1.0
        %v917 = vmul.f32 %v916, %v800
        %v918 = vand.u32 2147483647, %v800
        %vm919 = vcmp.lt.f32.partialorder %v918, 0.0004427343
        %v920 = vsel %vm919, %v917, %v914
        %v921 = vadd.f32 %v801, 1.0
        %v922 = vlog2.pop %v921
        %v923 = vmul.f32 %v922, 0.6931472
        %v924 = vmul.f32 -0.5, %v801
        %v925 = vadd.f32 %v924, 1.0
        %v926 = vmul.f32 %v925, %v801
        %v927 = vand.u32 2147483647, %v801
        %vm928 = vcmp.lt.f32.partialorder %v927, 0.0004427343
        %v929 = vsel %vm928, %v926, %v923
        %v930 = vadd.f32 %v802, 1.0
        %v931 = vlog2.pop %v930
        %v932 = vmul.f32 %v931, 0.6931472
        %v933 = vmul.f32 -0.5, %v802
        %v934 = vadd.f32 %v933, 1.0
        %v935 = vmul.f32 %v934, %v802
        %v936 = vand.u32 2147483647, %v802
        %vm937 = vcmp.lt.f32.partialorder %v936, 0.0004427343
        %v938 = vsel %vm937, %v935, %v932
        %v939 = vadd.f32 %v803, 1.0
        %v940 = vlog2.pop %v939
        %v941 = vmul.f32 %v940, 0.6931472
        %v942 = vmul.f32 -0.5, %v803
        %v943 = vadd.f32 %v942, 1.0
        %v944 = vmul.f32 %v943, %v803
        %v945 = vand.u32 2147483647, %v803
        %vm946 = vcmp.lt.f32.partialorder %v945, 0.0004427343
        %v947 = vsel %vm946, %v944, %v941
        %v948 = vadd.f32 %v804, 1.0
        %v949 = vlog2.pop %v948
        %v950 = vmul.f32 %v949, 0.6931472
        %v951 = vmul.f32 -0.5, %v804
        %v952 = vadd.f32 %v951, 1.0
        %v953 = vmul.f32 %v952, %v804
        %v954 = vand.u32 2147483647, %v804
        %vm955 = vcmp.lt.f32.partialorder %v954, 0.0004427343
        %v956 = vsel %vm955, %v953, %v950
        %v957 = vadd.f32 %v805, 1.0
        %v958 = vlog2.pop %v957
        %v959 = vmul.f32 %v958, 0.6931472
        %v960 = vmul.f32 -0.5, %v805
        %v961 = vadd.f32 %v960, 1.0
        %v962 = vmul.f32 %v961, %v805
        %v963 = vand.u32 2147483647, %v805
        %vm964 = vcmp.lt.f32.partialorder %v963, 0.0004427343
        %v965 = vsel %vm964, %v962, %v959
        %v966 = vadd.f32 %v806, 1.0
        %v967 = vlog2.pop %v966
        %v968 = vmul.f32 %v967, 0.6931472
        %v969 = vmul.f32 -0.5, %v806
        %v970 = vadd.f32 %v969, 1.0
        %v971 = vmul.f32 %v970, %v806
        %v972 = vand.u32 2147483647, %v806
        %vm973 = vcmp.lt.f32.partialorder %v972, 0.0004427343
        %v974 = vsel %vm973, %v971, %v968
        %v975 = vadd.f32 %v807, 1.0
        %v976 = vlog2.pop %v975
        %v977 = vmul.f32 %v976, 0.6931472
        %v978 = vmul.f32 -0.5, %v807
        %v979 = vadd.f32 %v978, 1.0
        %v980 = vmul.f32 %v979, %v807
        %v981 = vand.u32 2147483647, %v807
        %vm982 = vcmp.lt.f32.partialorder %v981, 0.0004427343
        %v983 = vsel %vm982, %v980, %v977
        %v984 = vadd.f32 %v808, 1.0
        %v985 = vlog2.pop %v984
        %v986 = vmul.f32 %v985, 0.6931472
        %v987 = vmul.f32 -0.5, %v808
        %v988 = vadd.f32 %v987, 1.0
        %v989 = vmul.f32 %v988, %v808
        %v990 = vand.u32 2147483647, %v808
        %vm991 = vcmp.lt.f32.partialorder %v990, 0.0004427343
        %v992 = vsel %vm991, %v989, %v986
        %v993 = vadd.f32 %v809, 1.0
        %v994 = vlog2.pop %v993
        %v995 = vmul.f32 %v994, 0.6931472
        %v996 = vmul.f32 -0.5, %v809
        %v997 = vadd.f32 %v996, 1.0
        %v998 = vmul.f32 %v997, %v809
        %v999 = vand.u32 2147483647, %v809
        %vm1000 = vcmp.lt.f32.partialorder %v999, 0.0004427343
        %v1001 = vsel %vm1000, %v998, %v995
        %v1002 = vadd.f32 %v810, 1.0
        %v1003 = vlog2.pop %v1002
        %v1004 = vmul.f32 %v1003, 0.6931472
        %v1005 = vmul.f32 -0.5, %v810
        %v1006 = vadd.f32 %v1005, 1.0
        %v1007 = vmul.f32 %v1006, %v810
        %v1008 = vand.u32 2147483647, %v810
        %vm1009 = vcmp.lt.f32.partialorder %v1008, 0.0004427343
        %v1010 = vsel %vm1009, %v1007, %v1004
        %v1011 = vadd.f32 %v811, 1.0
        %v1012 = vlog2.pop %v1011
        %v1013 = vmul.f32 %v1012, 0.6931472
        %v1014 = vmul.f32 -0.5, %v811
        %v1015 = vadd.f32 %v1014, 1.0
        %v1016 = vmul.f32 %v1015, %v811
        %v1017 = vand.u32 2147483647, %v811
        %vm1018 = vcmp.lt.f32.partialorder %v1017, 0.0004427343
        %v1019 = vsel %vm1018, %v1016, %v1013
        %v1020 = vadd.f32 %v812, 1.0
        %v1021 = vlog2.pop %v1020
        %v1022 = vmul.f32 %v1021, 0.6931472
        %v1023 = vmul.f32 -0.5, %v812
        %v1024 = vadd.f32 %v1023, 1.0
        %v1025 = vmul.f32 %v1024, %v812
        %v1026 = vand.u32 2147483647, %v812
        %vm1027 = vcmp.lt.f32.partialorder %v1026, 0.0004427343
        %v1028 = vsel %vm1027, %v1025, %v1022
        %v1029 = vadd.f32 %v813, 1.0
        %v1030 = vlog2.pop %v1029
        %v1031 = vmul.f32 %v1030, 0.6931472
        %v1032 = vmul.f32 -0.5, %v813
        %v1033 = vadd.f32 %v1032, 1.0
        %v1034 = vmul.f32 %v1033, %v813
        %v1035 = vand.u32 2147483647, %v813
        %vm1036 = vcmp.lt.f32.partialorder %v1035, 0.0004427343
        %v1037 = vsel %vm1036, %v1034, %v1031
        %v1038 = vadd.f32 %v814, 1.0
        %v1039 = vlog2.pop %v1038
        %v1040 = vmul.f32 %v1039, 0.6931472
        %v1041 = vmul.f32 -0.5, %v814
        %v1042 = vadd.f32 %v1041, 1.0
        %v1043 = vmul.f32 %v1042, %v814
        %v1044 = vand.u32 2147483647, %v814
        %vm1045 = vcmp.lt.f32.partialorder %v1044, 0.0004427343
        %v1046 = vsel %vm1045, %v1043, %v1040
        %v1047 = vadd.f32 %v815, 1.0
        %v1048 = vlog2.pop %v1047
        %v1049 = vmul.f32 %v1048, 0.6931472
        %v1050 = vmul.f32 -0.5, %v815
        %v1051 = vadd.f32 %v1050, 1.0
        %v1052 = vmul.f32 %v1051, %v815
        %v1053 = vand.u32 2147483647, %v815
        %vm1054 = vcmp.lt.f32.partialorder %v1053, 0.0004427343
        %v1055 = vsel %vm1054, %v1052, %v1049
        %v1056 = vadd.f32 %v816, 1.0
        %v1057 = vlog2.pop %v1056
        %v1058 = vmul.f32 %v1057, 0.6931472
        %v1059 = vmul.f32 -0.5, %v816
        %v1060 = vadd.f32 %v1059, 1.0
        %v1061 = vmul.f32 %v1060, %v816
        %v1062 = vand.u32 2147483647, %v816
        %vm1063 = vcmp.lt.f32.partialorder %v1062, 0.0004427343
        %v1064 = vsel %vm1063, %v1061, %v1058
        %v1065 = vadd.f32 %v817, 1.0
        %v1066 = vlog2.pop %v1065
        %v1067 = vmul.f32 %v1066, 0.6931472
        %v1068 = vmul.f32 -0.5, %v817
        %v1069 = vadd.f32 %v1068, 1.0
        %v1070 = vmul.f32 %v1069, %v817
        %v1071 = vand.u32 2147483647, %v817
        %vm1072 = vcmp.lt.f32.partialorder %v1071, 0.0004427343
        %v1073 = vsel %vm1072, %v1070, %v1067
        %v1074 = vadd.f32 %v818, 1.0
        %v1075 = vlog2.pop %v1074
        %v1076 = vmul.f32 %v1075, 0.6931472
        %v1077 = vmul.f32 -0.5, %v818
        %v1078 = vadd.f32 %v1077, 1.0
        %v1079 = vmul.f32 %v1078, %v818
        %v1080 = vand.u32 2147483647, %v818
        %vm1081 = vcmp.lt.f32.partialorder %v1080, 0.0004427343
        %v1082 = vsel %vm1081, %v1079, %v1076
        %v1083 = vadd.f32 %v819, 1.0
        %v1084 = vlog2.pop %v1083
        %v1085 = vmul.f32 %v1084, 0.6931472
        %v1086 = vmul.f32 -0.5, %v819
        %v1087 = vadd.f32 %v1086, 1.0
        %v1088 = vmul.f32 %v1087, %v819
        %v1089 = vand.u32 2147483647, %v819
        %vm1090 = vcmp.lt.f32.partialorder %v1089, 0.0004427343
        %v1091 = vsel %vm1090, %v1088, %v1085
        %v1092 = vadd.f32 %v820, 1.0
        %v1093 = vlog2.pop %v1092
        %v1094 = vmul.f32 %v1093, 0.6931472
        %v1095 = vmul.f32 -0.5, %v820
        %v1096 = vadd.f32 %v1095, 1.0
        %v1097 = vmul.f32 %v1096, %v820
        %v1098 = vand.u32 2147483647, %v820
        %vm1099 = vcmp.lt.f32.partialorder %v1098, 0.0004427343
        %v1100 = vsel %vm1099, %v1097, %v1094
        %v1101 = vadd.f32 %v821, 1.0
        %v1102 = vlog2.pop %v1101
        %v1103 = vmul.f32 %v1102, 0.6931472
        %v1104 = vmul.f32 -0.5, %v821
        %v1105 = vadd.f32 %v1104, 1.0
        %v1106 = vmul.f32 %v1105, %v821
        %v1107 = vand.u32 2147483647, %v821
        %vm1108 = vcmp.lt.f32.partialorder %v1107, 0.0004427343
        %v1109 = vsel %vm1108, %v1106, %v1103
        %v1110 = vlaneseq
        %v1111 = vshrl.u32 %v1110, 7
        %v1112 = vsub.s32 0, %v1111
        %v1113 = vrot.slane %v545, %v1112
        %v1114 = vsub.f32 %v1113, %v830
        %v1115 = vsub.f32 %v1113, %v839
        %v1116 = vsub.f32 %v1113, %v848
        %v1117 = vsub.f32 %v1113, %v857
        %v1118 = vsub.f32 %v1113, %v866
        %v1119 = vsub.f32 %v1113, %v875
        %v1120 = vsub.f32 %v1113, %v884
        %v1121 = vsub.f32 %v1113, %v893
        %v1122 = vsub.f32 %v1113, %v902
        %v1123 = vsub.f32 %v1113, %v911
        %v1124 = vsub.f32 %v1113, %v920
        %v1125 = vsub.f32 %v1113, %v929
        %v1126 = vsub.f32 %v1113, %v938
        %v1127 = vsub.f32 %v1113, %v947
        %v1128 = vsub.f32 %v1113, %v956
        %v1129 = vsub.f32 %v1113, %v965
        %v1130 = vsub.f32 %v1113, %v974
        %v1131 = vsub.f32 %v1113, %v983
        %v1132 = vsub.f32 %v1113, %v992
        %v1133 = vsub.f32 %v1113, %v1001
        %v1134 = vsub.f32 %v1113, %v1010
        %v1135 = vsub.f32 %v1113, %v1019
        %v1136 = vsub.f32 %v1113, %v1028
        %v1137 = vsub.f32 %v1113, %v1037
        %v1138 = vsub.f32 %v1113, %v1046
        %v1139 = vsub.f32 %v1113, %v1055
        %v1140 = vsub.f32 %v1113, %v1064
        %v1141 = vsub.f32 %v1113, %v1073
        %v1142 = vsub.f32 %v1113, %v1082
        %v1143 = vsub.f32 %v1113, %v1091
        %v1144 = vsub.f32 %v1113, %v1100
        %v1145 = vsub.f32 %v1113, %v1109
        %1146 = vst [vmem:[%s164 + $0x8] sm:$0xff] %v1114
        %1147 = vst [vmem:[%s164 + $0x18] sm:$0xff] %v1115
        %1148 = vst [vmem:[%s164 + $0x28] sm:$0xff] %v1116
        %1149 = vst [vmem:[%s164 + $0x38] sm:$0xff] %v1117
        %1150 = vst [vmem:[%s164 + $0x48] sm:$0xff] %v1118
        %1151 = vst [vmem:[%s164 + $0x58] sm:$0xff] %v1119
        %1152 = vst [vmem:[%s164 + $0x68] sm:$0xff] %v1120
        %1153 = vst [vmem:[%s164 + $0x78] sm:$0xff] %v1121
        %1154 = vst [vmem:[%s164 + $0x88] sm:$0xff] %v1122
        %1155 = vst [vmem:[%s164 + $0x98] sm:$0xff] %v1123
        %1156 = vst [vmem:[%s164 + $0xa8] sm:$0xff] %v1124
        %1157 = vst [vmem:[%s164 + $0xb8] sm:$0xff] %v1125
        %1158 = vst [vmem:[%s164 + $0xc8] sm:$0xff] %v1126
        %1159 = vst [vmem:[%s164 + $0xd8] sm:$0xff] %v1127
        %1160 = vst [vmem:[%s164 + $0xe8] sm:$0xff] %v1128
        %1161 = vst [vmem:[%s164 + $0xf8] sm:$0xff] %v1129
        %1162 = vst [vmem:[%s164 + $0x108] sm:$0xff] %v1130
        %1163 = vst [vmem:[%s164 + $0x118] sm:$0xff] %v1131
        %1164 = vst [vmem:[%s164 + $0x128] sm:$0xff] %v1132
        %1165 = vst [vmem:[%s164 + $0x138] sm:$0xff] %v1133
        %1166 = vst [vmem:[%s164 + $0x148] sm:$0xff] %v1134
        %1167 = vst [vmem:[%s164 + $0x158] sm:$0xff] %v1135
        %1168 = vst [vmem:[%s164 + $0x168] sm:$0xff] %v1136
        %1169 = vst [vmem:[%s164 + $0x178] sm:$0xff] %v1137
        %1170 = vst [vmem:[%s164 + $0x188] sm:$0xff] %v1138
        %1171 = vst [vmem:[%s164 + $0x198] sm:$0xff] %v1139
        %1172 = vst [vmem:[%s164 + $0x1a8] sm:$0xff] %v1140
        %1173 = vst [vmem:[%s164 + $0x1b8] sm:$0xff] %v1141
        %1174 = vst [vmem:[%s164 + $0x1c8] sm:$0xff] %v1142
        %1175 = vst [vmem:[%s164 + $0x1d8] sm:$0xff] %v1143
        %1176 = vst [vmem:[%s164 + $0x1e8] sm:$0xff] %v1144
        %1177 = vst [vmem:[%s164 + $0x1f8] sm:$0xff] %v1145
        %s1178 = sand.u32 %s93, 1
        %s1179 = scalar_lea.sflag [#allocation3], %s1178
        %s1180 = sand.u32 %s93, 1
        %s1181 = smul.addr %s1180, 512
        %s1182 = scalar_lea.vmem [#allocation2], %s1181
        // Predicated region
        $region33: #{tpu_custom_call.1} parent=31 // pred_check
          %p1183 = pneg %p103
        $region34: #{tpu_custom_call.1} parent=31 // pred_check_branch
          %1185 = sbr.rel (%p1183) target = $region36
        $region35: #{tpu_custom_call.1} parent=31 // pred_region
          %s1186 = smul.u32 32, %s17
          %s1188 = ssub.s32 8192, 8192
          %1189 = vsyncadd %s1179, %s1188
          %s1190 = smul.addr %s1186, 2
          %s1191 = smul.addr %s1190, 128
          %s1192 = scalar_lea.hbm %s3, %s1191
          %s1193 = sshll.u32 %s1182, 4
          %s1194 = int_to_ptr.vmem [resolvable:$true] %s1193
          %1199 = dma.vmem_to_hbm [thread:$0]  %s1194, 8192, %s1192, %s1179, 256, 256, 16
        $region36: #{tpu_custom_call.1} parent=31 // pred_fallthru
          _
      $region32: #{tpu_custom_call.1} parent=5 // pred_fallthru
        _
      %p1200 = scmp.le.s32.totalorder 2, %s12
      // Predicated region
      $region37: #{tpu_custom_call.1} parent=5 // pred_check
        %p1201 = pneg %p1200
      $region38: #{tpu_custom_call.1} parent=5 // pred_check_branch
        %1203 = sbr.rel (%p1201) target = $region40
      $region39: #{tpu_custom_call.1} parent=5 // pred_region
        %s1204 = ssub.s32 %s12, 2
        // Predicated region
        $region41: #{tpu_custom_call.1} parent=39 // pred_check
          %p1205 = pneg %p109
        $region42: #{tpu_custom_call.1} parent=39 // pred_check_branch
          %1207 = sbr.rel (%p1205) target = $region44
        $region43: #{tpu_custom_call.1} parent=39 // pred_region
          %s1208 = sand.u32 %s94, 1
          %s1209 = scalar_lea.sflag [#allocation3], %s1208
          %s1210 = sand.u32 %s94, 1
          %s1211 = smul.addr %s1210, 512
          %s1212 = scalar_lea.vmem [#allocation2], %s1211
          %1213 = dma.done %s1209, 8192
        $region44: #{tpu_custom_call.1} parent=39 // pred_fallthru
          _
      $region40: #{tpu_custom_call.1} parent=5 // pred_fallthru
        _
    $region6: #{tpu_custom_call.1} parent=1 // loop_footer
      %s16 = sadd.s32 1, %s12
    $region7: #{tpu_custom_call.1} parent=1 // loop_footer_branch
      %11 = sbr.rel target = $region3
    $region8: #{tpu_custom_call.1} parent=1 // loop_exit
      _
    %1214 = vsyncpa [#allocation3], 1
    %s1215 = scalar_lea.sflag [#allocation3], 1
    %1216 = vsyncpa %s1215, 1

</llo_original>
